<compile_context>
chip_gen: v7x
topology: tpu7x:2x2x1
jax: 0.10.0
libtpu: 0.0.40
codegen_flags: <defaults>
</compile_context>

<pallas_src>
import functools

import jax
import jax.numpy as jnp
from jax.experimental import pallas as pl
from jax.experimental.pallas import tpu as pltpu

IN_F = 12
HID_F = 21
OUT_F = 1


def _cdiv(a, b):
    return -(-a // b)


def _round_up(n, m):
    return _cdiv(n, m) * m


def _mlp_kernel(x_ref, w1_ref, b1_ref, w2c_ref, b2_ref, o_ref):
    # x_ref:   [TB, 12]  (native torch layout; batch on the sublane axis)
    # w1_ref:  [21, 12]  (torch fc1.weight layout; VMEM-resident)
    # b1_ref:  [21, 1]
    # w2c_ref: [21, 1]   (torch fc2.weight transposed to a column)
    # b2_ref:  [1, 1]
    # o_ref:   [1, TB]   (lane-dense output tile, unmasked stores)

    # In-kernel relayout to feature-major (XLU transpose): batch -> lane axis.
    xt = x_ref[...].T                                                  # [12, TB]

    # fc1: W1 @ x^T -> [21, TB] on the MXU, f32 accumulate.
    h = jnp.dot(w1_ref[...], xt, preferred_element_type=jnp.float32)
    # Bias is a lane-broadcast add; tanh goes to the EUP.
    h = jnp.tanh(h + b1_ref[...])

    # fc2 (21 -> 1): broadcast-mul + sublane reduce on VPU/XLU; the [1, TB]
    # result stays lane-dense for an unmasked store.
    y = jnp.sum(h * w2c_ref[...], axis=0, keepdims=True) + b2_ref[...]

    o_ref[...] = y.astype(o_ref.dtype)


def _pick_tile(batch, tb_target):
    """Tile size: 128-aligned, <= tb_target, >=2 (even) grid steps if possible."""
    b128 = _round_up(max(batch, 1), 128)
    n_steps = max(1, _cdiv(b128, tb_target))
    if b128 >= 256:
        n_steps = max(n_steps, 2)          # both v7x TensorCores get work
        n_steps += n_steps % 2             # even step count shards cleanly
    return _round_up(_cdiv(b128, n_steps), 128)


def _vmem_limit_bytes(tb, x_itemsize):
    """Rough scoped-VMEM model for the chosen tile size.

    The (tb, 12) x block pads its minor dim to 128 lanes in VMEM and is
    double-buffered; add the feature-major temporaries ([12->16, tb] xt plus a
    few [21->24, tb] f32 values) and the [1->8, tb] output double-buffer.
    """
    x_bufs = 2 * tb * 128 * x_itemsize
    temps = tb * (16 + 3 * 24) * 4
    out_bufs = 2 * tb * 8 * 4
    est = x_bufs + temps + out_bufs
    return int(min(max(32 << 20, 1.5 * est), 100 << 20))


def solar_power_forecast(x, w1, b1, w2, b2, *, tb=16384, input_dtype=None):
    """Pallas forward pass.

    x:  [B, 12] float32 (torch convention; consumed in-place, no wrapper copy)
    w1: [21, 12], b1: [21], w2: [1, 21], b2: [1]  (torch nn.Linear layouts)
    tb: target batch-tile (columns per grid step).  Default 16384 keeps the
        per-step DMA well above the ~0.35us step overhead while staying inside
        v7x's 64 MiB VMEM; v5e/v6e can go larger.
    input_dtype: optionally jnp.bfloat16 to halve x's HBM stream (cast should
        happen at the producer; slightly relaxes f32 parity).
    returns [B, 1] float32
    """
    B = x.shape[0]
    tb_target = max(128, (int(tb) // 128) * 128)
    tb = _pick_tile(B, tb_target)

    in_dtype = jnp.dtype(input_dtype) if input_dtype is not None else jnp.float32
    x_in = x.astype(in_dtype)
    w1_in = w1.astype(in_dtype)
    b1c = b1.reshape(HID_F, 1).astype(jnp.float32)
    w2c = w2.reshape(OUT_F, HID_F).T.astype(jnp.float32)          # [21, 1]
    b2c = b2.reshape(1, 1).astype(jnp.float32)

    # Tiny batches (< one tile): pad rows so the single (tb, 12) block stays
    # in-bounds.  For B >= tb the standard partial last block covers the
    # remainder -- no wrapper-side copy of x.
    if B < tb:
        x_in = jnp.pad(x_in, ((0, tb - B), (0, 0)))

    B_out = _round_up(B, tb)       # output-only padding (allocated by Pallas)
    grid = (B_out // tb,)

    cost = pl.CostEstimate(
        flops=2 * B * (IN_F * HID_F + HID_F * OUT_F),
        transcendentals=B * HID_F,
        bytes_accessed=int(
            B * (IN_F * x_in.dtype.itemsize + OUT_F * 4)
            + 4 * (HID_F * (IN_F + 2) + 1)
        ),
    )

    y_pad = pl.pallas_call(
        _mlp_kernel,
        out_shape=jax.ShapeDtypeStruct((1, B_out), jnp.float32),
        grid=grid,
        in_specs=[
            pl.BlockSpec((tb, IN_F), lambda i: (i, 0)),      # x tile, pipelined
            pl.BlockSpec((HID_F, IN_F), lambda i: (0, 0)),   # weights: resident
            pl.BlockSpec((HID_F, 1), lambda i: (0, 0)),
            pl.BlockSpec((HID_F, 1), lambda i: (0, 0)),
            pl.BlockSpec((1, 1), lambda i: (0, 0)),
        ],
        out_specs=pl.BlockSpec((1, tb), lambda i: (0, i)),   # lane-dense output
        compiler_params=pltpu.CompilerParams(
            dimension_semantics=("parallel",),               # batch across TCs
            vmem_limit_bytes=_vmem_limit_bytes(tb, x_in.dtype.itemsize),
        ),
        cost_estimate=cost,
    )(x_in, w1_in, b1c, w2c, b2c)

    # Avoid the slice copy when no padding happened.
    y = y_pad[0] if B_out == B else y_pad[0, :B]
    return y.reshape(B, OUT_F)


def solar_power_forecast_ref(x, w1, b1, w2, b2):
    """Pure-JAX reference (same math, torch layouts)."""
    return jnp.tanh(x @ w1.T + b1) @ w2.T + b2


def forward(x, w1, b1, w2, b2, *, min_pallas_batch=16384, tb=16384):
    """Dispatcher: launch-latency-bound small batches stay on the fused XLA path."""
    if x.shape[0] < min_pallas_batch:
        return solar_power_forecast_ref(x, w1, b1, w2, b2)
    return solar_power_forecast(x, w1, b1, w2, b2, tb=tb)


def init_params(key):
    """Deterministic init mimicking torch.nn.Linear U(-1/sqrt(fan_in), +...).

    Returned in torch layouts: w1 [21,12], b1 [21], w2 [1,21], b2 [1].
    """
    k1, k2, k3, k4 = jax.random.split(key, 4)
    bound1 = 1.0 / jnp.sqrt(float(IN_F))
    bound2 = 1.0 / jnp.sqrt(float(HID_F))
    w1 = jax.random.uniform(k1, (HID_F, IN_F), jnp.float32, -bound1, bound1)
    b1 = jax.random.uniform(k2, (HID_F,), jnp.float32, -bound1, bound1)
    w2 = jax.random.uniform(k3, (OUT_F, HID_F), jnp.float32, -bound2, bound2)
    b2 = jax.random.uniform(k4, (OUT_F,), jnp.float32, -bound2, bound2)
    return w1, b1, w2, b2


# TODO(synk): backward_lm (Levenberg-Marquardt: per-sample Jacobian stacking +
# torch.linalg.solve) is a training-time solver, not part of the forward hot
# path; it is intentionally not implemented as a Pallas kernel.


if __name__ == "__main__":
    key = jax.random.PRNGKey(0)
    k_params, k_x1, k_x2 = jax.random.split(key, 3)
    w1, b1, w2, b2 = init_params(k_params)

    # Case 1: non-multiple-of-tile batch -> multi-step grid + partial last
    # input block (no wrapper transpose / pad of x).
    B1 = 2000
    x1 = jax.random.normal(k_x1, (B1, IN_F), jnp.float32)
    y1 = solar_power_forecast(x1, w1, b1, w2, b2, tb=512)   # 4 grid steps
    y1 = jax.block_until_ready(y1)
    y1_ref = solar_power_forecast_ref(x1, w1, b1, w2, b2)
    assert y1.shape == (B1, OUT_F)
    assert jnp.allclose(y1, y1_ref, atol=1e-5, rtol=1e-5)

    # Case 2: tiny batch through the same kernel (single 128-wide tile).
    B2 = 8
    x2 = jax.random.normal(k_x2, (B2, IN_F), jnp.float32)
    y2 = solar_power_forecast(x2, w1, b1, w2, b2)
    y2 = jax.block_until_ready(y2)
    y2_ref = solar_power_forecast_ref(x2, w1, b1, w2, b2)
    assert y2.shape == (B2, OUT_F)
    assert jnp.allclose(y2, y2_ref, atol=1e-5, rtol=1e-5)

    print("KERNEL_OK")
</pallas_src>

<mosaic_0001>
module attributes {stable_mosaic.version = 11 : i64} {
  func.func @_mlp_kernel(%arg0: i32, %arg1: memref<512x12xf32, #tpu.memory_space<vmem>>, %arg2: memref<21x12xf32, #tpu.memory_space<vmem>>, %arg3: memref<21x1xf32, #tpu.memory_space<vmem>>, %arg4: memref<21x1xf32, #tpu.memory_space<vmem>>, %arg5: memref<1x1xf32, #tpu.memory_space<vmem>>, %arg6: memref<1x512xf32, #tpu.memory_space<vmem>>) attributes {dimension_semantics = [#tpu.dimension_semantics<parallel>], iteration_bounds = array<i64: 4>, scalar_prefetch = 0 : i64, scratch_operands = 0 : i64, tpu.core_type = #tpu.core_type<tc>, window_params = [{transform_indices = @transform_0, window_bounds = array<i64: 512, 12>}, {pipeline_mode = #tpu.pipeline_mode<synchronous>, transform_indices = @transform_1, window_bounds = array<i64: 21, 12>}, {pipeline_mode = #tpu.pipeline_mode<synchronous>, transform_indices = @transform_2, window_bounds = array<i64: 21, 1>}, {pipeline_mode = #tpu.pipeline_mode<synchronous>, transform_indices = @transform_3, window_bounds = array<i64: 21, 1>}, {pipeline_mode = #tpu.pipeline_mode<synchronous>, transform_indices = @transform_4, window_bounds = array<i64: 1, 1>}, {transform_indices = @transform_5, window_bounds = array<i64: 1, 512>}]} {
    %c0 = arith.constant 0 : index
    %c0_0 = arith.constant 0 : index
    %0 = vector.load %arg1[%c0, %c0_0] : memref<512x12xf32, #tpu.memory_space<vmem>>, vector<512x12xf32>
    %1 = tpu.transpose %0, [1, 0] : vector<512x12xf32> -> vector<12x512xf32>
    %c0_1 = arith.constant 0 : index
    %c0_2 = arith.constant 0 : index
    %2 = vector.load %arg2[%c0_1, %c0_2] : memref<21x12xf32, #tpu.memory_space<vmem>>, vector<21x12xf32>
    %cst = arith.constant dense<0.000000e+00> : vector<21x512xf32>
    %3 = tpu.matmul %2, %1, %cst {dimension_numbers = #tpu.dot_dimension_numbers<[1], [0], [0], [1], [0, 0, 1, 1], [], []>} : vector<21x12xf32>, vector<12x512xf32>, vector<21x512xf32> -> vector<21x512xf32>
    %c0_3 = arith.constant 0 : index
    %c0_4 = arith.constant 0 : index
    %4 = vector.load %arg3[%c0_3, %c0_4] : memref<21x1xf32, #tpu.memory_space<vmem>>, vector<21x1xf32>
    %5 = vector.broadcast %4 : vector<21x1xf32> to vector<21x512xf32>
    %6 = arith.addf %3, %5 : vector<21x512xf32>
    %7 = math.tanh %6 : vector<21x512xf32>
    %c0_5 = arith.constant 0 : index
    %c0_6 = arith.constant 0 : index
    %8 = vector.load %arg4[%c0_5, %c0_6] : memref<21x1xf32, #tpu.memory_space<vmem>>, vector<21x1xf32>
    %9 = vector.broadcast %8 : vector<21x1xf32> to vector<21x512xf32>
    %10 = arith.mulf %7, %9 : vector<21x512xf32>
    %cst_7 = arith.constant dense<0.000000e+00> : vector<512xf32>
    %11 = vector.multi_reduction <add>, %10, %cst_7 [0] : vector<21x512xf32> to vector<512xf32>
    %12 = vector.shape_cast %11 : vector<512xf32> to vector<1x512xf32>
    %c0_8 = arith.constant 0 : index
    %c0_9 = arith.constant 0 : index
    %13 = vector.load %arg5[%c0_8, %c0_9] : memref<1x1xf32, #tpu.memory_space<vmem>>, vector<1x1xf32>
    %14 = vector.broadcast %13 : vector<1x1xf32> to vector<1x512xf32>
    %15 = arith.addf %12, %14 : vector<1x512xf32>
    %c0_10 = arith.constant 0 : index
    %c0_11 = arith.constant 0 : index
    %16 = vector.load %arg6[%c0_10, %c0_11] : memref<1x512xf32, #tpu.memory_space<vmem>>, vector<1x512xf32>
    tpu.vector_store %arg6[%c0_10, %c0_11], %15 {strides = array<i32>} : memref<1x512xf32, #tpu.memory_space<vmem>>, vector<1x512xf32>,
    return
  }
  func.func @transform_0(%arg0: i32) -> (i32, i32) {
    %c0_i32 = arith.constant 0 : i32
    %c0_i32_0 = arith.constant 0 : i32
    return %arg0, %c0_i32 : i32, i32
  }
  func.func @transform_1(%arg0: i32) -> (i32, i32) {
    %c0_i32 = arith.constant 0 : i32
    %c0_i32_0 = arith.constant 0 : i32
    %c0_i32_1 = arith.constant 0 : i32
    return %c0_i32, %c0_i32_0 : i32, i32
  }
  func.func @transform_2(%arg0: i32) -> (i32, i32) {
    %c0_i32 = arith.constant 0 : i32
    %c0_i32_0 = arith.constant 0 : i32
    %c0_i32_1 = arith.constant 0 : i32
    return %c0_i32, %c0_i32_0 : i32, i32
  }
  func.func @transform_3(%arg0: i32) -> (i32, i32) {
    %c0_i32 = arith.constant 0 : i32
    %c0_i32_0 = arith.constant 0 : i32
    %c0_i32_1 = arith.constant 0 : i32
    return %c0_i32, %c0_i32_0 : i32, i32
  }
  func.func @transform_4(%arg0: i32) -> (i32, i32) {
    %c0_i32 = arith.constant 0 : i32
    %c0_i32_0 = arith.constant 0 : i32
    %c0_i32_1 = arith.constant 0 : i32
    return %c0_i32, %c0_i32_0 : i32, i32
  }
  func.func @transform_5(%arg0: i32) -> (i32, i32) {
    %c0_i32 = arith.constant 0 : i32
    %c0_i32_0 = arith.constant 0 : i32
    return %c0_i32, %arg0 : i32, i32
  }
}

</mosaic_0001>

<llo_original>
// kernel: tpu_custom_call.1
$region0: #{tpu_custom_call.1}
  #allocation0 [shape = 'u32[]', space=smem, size = 0x4, offset = 0x4, fixed_abs, tag = 'smem constant byte address 0x4 - core index']
  #allocation1 [shape = 'u32[144,128]{1,0:T(1,128)}', space=vmem, size = 0x12000, scoped, tag = 'internal scratch']
  #allocation2 [shape = 'f32[1,1]{1,0:T(1,128)S(1)}', space=vmem, size = 0x200, scoped, tag = 'scoped memory for tpu_custom_call.1']
  %s0 = inlined_call_operand.vmem [shape: f32[2000,12], index: 0, kind: input, shape index: {}]
  %s1 = inlined_call_operand.vmem [shape: f32[21,12], index: 1, kind: input, shape index: {}]
  %s2 = inlined_call_operand.vmem [shape: f32[21,1], index: 2, kind: input, shape index: {}]
  %s3 = inlined_call_operand.vmem [shape: f32[21,1], index: 3, kind: input, shape index: {}]
  %s4 = inlined_call_operand.<no memory space> [shape: f32[1,1], index: 4, kind: input, shape index: {}]
  %s5 = inlined_call_operand.hbm [shape: f32[1,2048], index: 5, kind: output, shape index: {}]
  %s6 = sld [smem:[#allocation0]]
  $region53: #{tpu_custom_call.1} parent=0
    _
  %s8 = ssub.s32 1, %s6
  %s9 = scalar_select 0, %s8, %s6
  %v10 = vstv %s4
  %11 = vst [vmem:[#allocation2] sm:$0x1] %v10
  $region1: #{tpu_custom_call.1} parent=0
    #allocation3 [shape = 'u8[4096]{0}', space=vmem, size = 0x1000, scoped, tag = 'output window, operand 0']
    #allocation4 [shape = 's32[2]{0}', space=sflag, size = 0x8, scoped, tag = 'scoped memory for tpu_custom_call.1']
    %12 = vsyncpa [#allocation4], 0
    %s13 = scalar_lea.sflag [#allocation4], 1
    %14 = vsyncpa %s13, 0
    loop: start=0, step=1, limit=6
    $region2: #{tpu_custom_call.1} parent=1 // loop_pre_header
      _
    $region3: #{tpu_custom_call.1} parent=1 // loop_header
      %s16 = sphi 0, %s20
      %p17 = scmp.ge.s32.totalorder %s16, 6
      %s26 = sphi 0, %s28
      %s29 = sphi 0, %s26
      %s30 = sphi 0, %s29
      %s46 = sphi 0, %s30
      %s50 = sphi 0, %s50
      %s52 = sphi 0, %s50
      %s53 = sphi 0, %s52
      %s67 = sphi 0, %s53
      %s71 = sphi 0, %s71
      %s73 = sphi 0, %s71
      %s74 = sphi 0, %s73
      %s88 = sphi 0, %s74
      %s92 = sphi 0, %s92
      %s94 = sphi 0, %s92
      %s95 = sphi 0, %s94
      %s109 = sphi 0, %s95
      %s113 = sphi 0, %s113
      %s115 = sphi 0, %s113
      %s116 = sphi 0, %s115
      %s130 = sphi 0, %s116
      %s136 = sphi 0, %s138
      %s139 = sphi 0, %s136
      %s140 = sphi 0, %s139
      %s156 = sphi 0, %s140
    $region4: #{tpu_custom_call.1} parent=1 // loop_header_branch
      %19 = sbr.rel (%p17) target = $region8
    $region5: #{tpu_custom_call.1} parent=1 // loop_body
      %s21 = ssub.s32 %s16, 1
      %s22 = ssub.s32 %s16, 2
      %s23 = sadd.s32 %s16, 1
      %s24 = ssub.s32 %s16, %s23
      %p25 = scmp.eq.s32.totalorder %s24, 0
      %s27 = sadd.s32 %s26, 1
      %s28 = scalar_select %p25, %s26, %s27
      %p31 = pneg %p25
      %p32 = scmp.eq.s32.totalorder %s16, 3
      %p33 = por %p31, %p32
      %p34 = scmp.ne.s32.totalorder %s26, %s29
      %p35 = scmp.eq.s32.totalorder %s16, 0
      %p36 = por %p34, %p35
      %p37 = scmp.ne.s32.totalorder %s26, %s29
      %p38 = scmp.eq.s32.totalorder %s21, 3
      %p39 = por %p37, %p38
      %p40 = scmp.ne.s32.totalorder %s29, %s30
      %p41 = scmp.eq.s32.totalorder %s21, 0
      %p42 = por %p40, %p41
      %p43 = scmp.ne.s32.totalorder %s29, %s30
      %p44 = scmp.eq.s32.totalorder %s22, 3
      %p45 = por %p43, %p44
      %p47 = scmp.ne.s32.totalorder %s30, %s46
      %p48 = scmp.eq.s32.totalorder %s22, 0
      %p49 = por %p47, %p48
      %s51 = sadd.s32 %s50, 1
      %p54 = scmp.eq.s32.totalorder %s16, 3
      %p55 = scmp.ne.s32.totalorder %s50, %s52
      %p56 = scmp.eq.s32.totalorder %s16, 0
      %p57 = por %p55, %p56
      %p58 = scmp.ne.s32.totalorder %s50, %s52
      %p59 = scmp.eq.s32.totalorder %s21, 3
      %p60 = por %p58, %p59
      %p61 = scmp.ne.s32.totalorder %s52, %s53
      %p62 = scmp.eq.s32.totalorder %s21, 0
      %p63 = por %p61, %p62
      %p64 = scmp.ne.s32.totalorder %s52, %s53
      %p65 = scmp.eq.s32.totalorder %s22, 3
      %p66 = por %p64, %p65
      %p68 = scmp.ne.s32.totalorder %s53, %s67
      %p69 = scmp.eq.s32.totalorder %s22, 0
      %p70 = por %p68, %p69
      %s72 = sadd.s32 %s71, 1
      %p75 = scmp.eq.s32.totalorder %s16, 3
      %p76 = scmp.ne.s32.totalorder %s71, %s73
      %p77 = scmp.eq.s32.totalorder %s16, 0
      %p78 = por %p76, %p77
      %p79 = scmp.ne.s32.totalorder %s71, %s73
      %p80 = scmp.eq.s32.totalorder %s21, 3
      %p81 = por %p79, %p80
      %p82 = scmp.ne.s32.totalorder %s73, %s74
      %p83 = scmp.eq.s32.totalorder %s21, 0
      %p84 = por %p82, %p83
      %p85 = scmp.ne.s32.totalorder %s73, %s74
      %p86 = scmp.eq.s32.totalorder %s22, 3
      %p87 = por %p85, %p86
      %p89 = scmp.ne.s32.totalorder %s74, %s88
      %p90 = scmp.eq.s32.totalorder %s22, 0
      %p91 = por %p89, %p90
      %s93 = sadd.s32 %s92, 1
      %p96 = scmp.eq.s32.totalorder %s16, 3
      %p97 = scmp.ne.s32.totalorder %s92, %s94
      %p98 = scmp.eq.s32.totalorder %s16, 0
      %p99 = por %p97, %p98
      %p100 = scmp.ne.s32.totalorder %s92, %s94
      %p101 = scmp.eq.s32.totalorder %s21, 3
      %p102 = por %p100, %p101
      %p103 = scmp.ne.s32.totalorder %s94, %s95
      %p104 = scmp.eq.s32.totalorder %s21, 0
      %p105 = por %p103, %p104
      %p106 = scmp.ne.s32.totalorder %s94, %s95
      %p107 = scmp.eq.s32.totalorder %s22, 3
      %p108 = por %p106, %p107
      %p110 = scmp.ne.s32.totalorder %s95, %s109
      %p111 = scmp.eq.s32.totalorder %s22, 0
      %p112 = por %p110, %p111
      %s114 = sadd.s32 %s113, 1
      %p117 = scmp.eq.s32.totalorder %s16, 3
      %p118 = scmp.ne.s32.totalorder %s113, %s115
      %p119 = scmp.eq.s32.totalorder %s16, 0
      %p120 = por %p118, %p119
      %p121 = scmp.ne.s32.totalorder %s113, %s115
      %p122 = scmp.eq.s32.totalorder %s21, 3
      %p123 = por %p121, %p122
      %p124 = scmp.ne.s32.totalorder %s115, %s116
      %p125 = scmp.eq.s32.totalorder %s21, 0
      %p126 = por %p124, %p125
      %p127 = scmp.ne.s32.totalorder %s115, %s116
      %p128 = scmp.eq.s32.totalorder %s22, 3
      %p129 = por %p127, %p128
      %p131 = scmp.ne.s32.totalorder %s116, %s130
      %p132 = scmp.eq.s32.totalorder %s22, 0
      %p133 = por %p131, %p132
      %s134 = ssub.s32 %s16, %s23
      %p135 = scmp.eq.s32.totalorder %s134, 0
      %s137 = sadd.s32 %s136, 1
      %s138 = scalar_select %p135, %s136, %s137
      %p141 = pneg %p135
      %p142 = scmp.eq.s32.totalorder %s16, 3
      %p143 = por %p141, %p142
      %p144 = scmp.ne.s32.totalorder %s136, %s139
      %p145 = scmp.eq.s32.totalorder %s16, 0
      %p146 = por %p144, %p145
      %p147 = scmp.ne.s32.totalorder %s136, %s139
      %p148 = scmp.eq.s32.totalorder %s21, 3
      %p149 = por %p147, %p148
      %p150 = scmp.ne.s32.totalorder %s139, %s140
      %p151 = scmp.eq.s32.totalorder %s21, 0
      %p152 = por %p150, %p151
      %p153 = scmp.ne.s32.totalorder %s139, %s140
      %p154 = scmp.eq.s32.totalorder %s22, 3
      %p155 = por %p153, %p154
      %p157 = scmp.ne.s32.totalorder %s140, %s156
      %p158 = scmp.eq.s32.totalorder %s22, 0
      %p159 = por %p157, %p158
      %p160 = scmp.le.s32.totalorder 1, %s16
      %p161 = scmp.lt.s32.totalorder %s16, 5
      %p162 = pnand %p160, %p161
      %p163 = pneg %p162
      // Predicated region
      $region9: #{tpu_custom_call.1} parent=5 // pred_check
        _
      $region10: #{tpu_custom_call.1} parent=5 // pred_check_branch
        %165 = sbr.rel (%p162) target = $region12
      $region11: #{tpu_custom_call.1} parent=5 // pred_region
        %s166 = ssub.s32 %s16, 1
        // Predicated region
        $region13: #{tpu_custom_call.1} parent=11 // pred_check
          %p167 = pneg %p63
        $region14: #{tpu_custom_call.1} parent=11 // pred_check_branch
          %169 = sbr.rel (%p167) target = $region16
        $region15: #{tpu_custom_call.1} parent=11 // pred_region
          _
        $region16: #{tpu_custom_call.1} parent=11 // pred_fallthru
          _
        // Predicated region
        $region17: #{tpu_custom_call.1} parent=11 // pred_check
          %p170 = pneg %p84
        $region18: #{tpu_custom_call.1} parent=11 // pred_check_branch
          %172 = sbr.rel (%p170) target = $region20
        $region19: #{tpu_custom_call.1} parent=11 // pred_region
          _
        $region20: #{tpu_custom_call.1} parent=11 // pred_fallthru
          _
        // Predicated region
        $region21: #{tpu_custom_call.1} parent=11 // pred_check
          %p173 = pneg %p105
        $region22: #{tpu_custom_call.1} parent=11 // pred_check_branch
          %175 = sbr.rel (%p173) target = $region24
        $region23: #{tpu_custom_call.1} parent=11 // pred_region
          _
        $region24: #{tpu_custom_call.1} parent=11 // pred_fallthru
          _
        // Predicated region
        $region25: #{tpu_custom_call.1} parent=11 // pred_check
          %p176 = pneg %p126
        $region26: #{tpu_custom_call.1} parent=11 // pred_check_branch
          %178 = sbr.rel (%p176) target = $region28
        $region27: #{tpu_custom_call.1} parent=11 // pred_region
          _
        $region28: #{tpu_custom_call.1} parent=11 // pred_fallthru
          _
      $region12: #{tpu_custom_call.1} parent=5 // pred_fallthru
        _
      %p179 = scmp.lt.s32.totalorder %s16, 4
      // Predicated region
      $region29: #{tpu_custom_call.1} parent=5 // pred_check
        %p180 = pneg %p179
      $region30: #{tpu_custom_call.1} parent=5 // pred_check_branch
        %182 = sbr.rel (%p180) target = $region32
      $region31: #{tpu_custom_call.1} parent=5 // pred_region
        // Predicated region
        $region33: #{tpu_custom_call.1} parent=31 // pred_check
          %p183 = pneg %p36
        $region34: #{tpu_custom_call.1} parent=31 // pred_check_branch
          %185 = sbr.rel (%p183) target = $region36
        $region35: #{tpu_custom_call.1} parent=31 // pred_region
          %s186 = smul.u32 64, %s16
          %s187 = ssub.s32 250, %s186
          %p188 = scmp.lt.s32.totalorder %s187, 64
          %s189 = scalar_select %p188, %s187, 64
          %s190 = smul.u32 128, %s189
          %p191 = scmp.lt.s32.totalorder %s186, 249
          %s192 = scalar_select %p191, %s186, 249
          %s193 = smul.addr %s192, 8
          %s194 = scalar_lea.vmem %s0, %s193
          %s195 = smul.u32 64, %s16
          %s196 = ssub.s32 250, %s195
          %p197 = scmp.lt.s32.totalorder %s196, 64
          %s198 = scalar_select %p197, %s196, 64
          %s199 = smul.u32 128, %s198
        $region36: #{tpu_custom_call.1} parent=31 // pred_fallthru
          _
      $region32: #{tpu_custom_call.1} parent=5 // pred_fallthru
        _
      %p200 = scmp.le.s32.totalorder 1, %s16
      %p201 = scmp.lt.s32.totalorder %s16, 5
      %p202 = pnand %p200, %p201
      %p203 = pneg %p202
      // Predicated region
      $region37: #{tpu_custom_call.1} parent=5 // pred_check
        _
      $region38: #{tpu_custom_call.1} parent=5 // pred_check_branch
        %205 = sbr.rel (%p202) target = $region40
      $region39: #{tpu_custom_call.1} parent=5 // pred_region
        %s206 = ssub.s32 %s16, 1
        %s207 = smul.u32 64, %s21
        %s208 = ssub.s32 250, %s207
        %p209 = scmp.lt.s32.totalorder %s208, 64
        %s210 = scalar_select %p209, %s208, 64
        %s211 = smul.u32 128, %s210
        %p212 = scmp.lt.s32.totalorder %s207, 249
        %s213 = scalar_select %p212, %s207, 249
        %s214 = smul.addr %s213, 8
        %s215 = scalar_lea.vmem %s0, %s214
        %p216 = pneg %p42
        %p217 = pneg %p39
        %p218 = pneg %p63
        %p219 = pneg %p60
        %p220 = pneg %p84
        %p221 = pneg %p81
        %p222 = pneg %p105
        %p223 = pneg %p102
        %p224 = pneg %p126
        %p225 = pneg %p123
        %p226 = pneg %p152
        %p227 = pneg %p149
        %s228 = sand.u32 %s139, 1
        %s229 = scalar_lea.sflag [#allocation4], %s228
        %s230 = sand.u32 %s139, 1
        %s231 = smul.addr %s230, 4
        %s232 = scalar_lea.vmem [#allocation3], %s231
        %s233 = smul.u32 64, %s21
        %s234 = ssub.s32 250, %s233
        %p235 = scmp.lt.s32.totalorder %s234, 64
        %s236 = scalar_select %p235, %s234, 64
        %s237 = smul.u32 128, %s236
        %p238 = scmp.lt.s32.totalorder %s233, 249
        %s239 = scalar_select %p238, %s233, 249
        %s240 = smul.addr %s239, 8
        %s241 = scalar_lea.vmem %s0, %s240
        %s242 = smul.u32 64, %s21
        %s243 = ssub.s32 250, %s242
        %p244 = scmp.lt.s32.totalorder %s243, 64
        %s245 = scalar_select %p244, %s243, 64
        %s246 = smul.u32 128, %s245
        %s247 = smul.u32 4, %s21
        %v248 = vld [vmem:[%s241] sm:$0xff]
        %v249 = vld [vmem:[%s241 + $0x8] sm:$0xff]
        %v250 = vld [vmem:[%s241 + $0x10] sm:$0xff]
        %v251 = vld [vmem:[%s241 + $0x18] sm:$0xff]
        %v252 = vld [vmem:[%s241 + $0x20] sm:$0xff]
        %v253 = vld [vmem:[%s241 + $0x28] sm:$0xff]
        %v254 = vld [vmem:[%s241 + $0x30] sm:$0xff]
        %v255 = vld [vmem:[%s241 + $0x38] sm:$0xff]
        %v256 = vld [vmem:[%s241 + $0x40] sm:$0xff]
        %v257 = vld [vmem:[%s241 + $0x48] sm:$0xff]
        %v258 = vld [vmem:[%s241 + $0x50] sm:$0xff]
        %v259 = vld [vmem:[%s241 + $0x58] sm:$0xff]
        %v260 = vld [vmem:[%s241 + $0x60] sm:$0xff]
        %v261 = vld [vmem:[%s241 + $0x68] sm:$0xff]
        %v262 = vld [vmem:[%s241 + $0x70] sm:$0xff]
        %v263 = vld [vmem:[%s241 + $0x78] sm:$0xff]
        %v264 = vld [vmem:[%s241 + $0x80] sm:$0xff]
        %v265 = vld [vmem:[%s241 + $0x88] sm:$0xff]
        %v266 = vld [vmem:[%s241 + $0x90] sm:$0xff]
        %v267 = vld [vmem:[%s241 + $0x98] sm:$0xff]
        %v268 = vld [vmem:[%s241 + $0xa0] sm:$0xff]
        %v269 = vld [vmem:[%s241 + $0xa8] sm:$0xff]
        %v270 = vld [vmem:[%s241 + $0xb0] sm:$0xff]
        %v271 = vld [vmem:[%s241 + $0xb8] sm:$0xff]
        %v272 = vld [vmem:[%s241 + $0xc0] sm:$0xff]
        %v273 = vld [vmem:[%s241 + $0xc8] sm:$0xff]
        %v274 = vld [vmem:[%s241 + $0xd0] sm:$0xff]
        %v275 = vld [vmem:[%s241 + $0xd8] sm:$0xff]
        %v276 = vld [vmem:[%s241 + $0xe0] sm:$0xff]
        %v277 = vld [vmem:[%s241 + $0xe8] sm:$0xff]
        %v278 = vld [vmem:[%s241 + $0xf0] sm:$0xff]
        %v279 = vld [vmem:[%s241 + $0xf8] sm:$0xff]
        %v280 = vld [vmem:[%s241 + $0x100] sm:$0xff]
        %v281 = vld [vmem:[%s241 + $0x108] sm:$0xff]
        %v282 = vld [vmem:[%s241 + $0x110] sm:$0xff]
        %v283 = vld [vmem:[%s241 + $0x118] sm:$0xff]
        %v284 = vld [vmem:[%s241 + $0x120] sm:$0xff]
        %v285 = vld [vmem:[%s241 + $0x128] sm:$0xff]
        %v286 = vld [vmem:[%s241 + $0x130] sm:$0xff]
        %v287 = vld [vmem:[%s241 + $0x138] sm:$0xff]
        %v288 = vld [vmem:[%s241 + $0x140] sm:$0xff]
        %v289 = vld [vmem:[%s241 + $0x148] sm:$0xff]
        %v290 = vld [vmem:[%s241 + $0x150] sm:$0xff]
        %v291 = vld [vmem:[%s241 + $0x158] sm:$0xff]
        %v292 = vld [vmem:[%s241 + $0x160] sm:$0xff]
        %v293 = vld [vmem:[%s241 + $0x168] sm:$0xff]
        %v294 = vld [vmem:[%s241 + $0x170] sm:$0xff]
        %v295 = vld [vmem:[%s241 + $0x178] sm:$0xff]
        %v296 = vld [vmem:[%s241 + $0x180] sm:$0xff]
        %v297 = vld [vmem:[%s241 + $0x188] sm:$0xff]
        %v298 = vld [vmem:[%s241 + $0x190] sm:$0xff]
        %v299 = vld [vmem:[%s241 + $0x198] sm:$0xff]
        %v300 = vld [vmem:[%s241 + $0x1a0] sm:$0xff]
        %v301 = vld [vmem:[%s241 + $0x1a8] sm:$0xff]
        %v302 = vld [vmem:[%s241 + $0x1b0] sm:$0xff]
        %v303 = vld [vmem:[%s241 + $0x1b8] sm:$0xff]
        %v304 = vld [vmem:[%s241 + $0x1c0] sm:$0xff]
        %v305 = vld [vmem:[%s241 + $0x1c8] sm:$0xff]
        %v306 = vld [vmem:[%s241 + $0x1d0] sm:$0xff]
        %v307 = vld [vmem:[%s241 + $0x1d8] sm:$0xff]
        %v308 = vld [vmem:[%s241 + $0x1e0] sm:$0xff]
        %v309 = vld [vmem:[%s241 + $0x1e8] sm:$0xff]
        %v310 = vld [vmem:[%s241 + $0x1f0] sm:$0xff]
        %v311 = vld [vmem:[%s241 + $0x1f8] sm:$0xff]
        %v312 = vld [vmem:[%s1] sm:$0xff]
        %v313 = vld [vmem:[%s1 + $0x8] sm:$0xff]
        %v314 = vld [vmem:[%s1 + $0x10] sm:$0x1f]
        %v315 = vld [vmem:[%s2] sm:$0xff]
        %v316 = vld [vmem:[%s2 + $0x8] sm:$0xff]
        %v317 = vld [vmem:[%s2 + $0x10] sm:$0x1f]
        %319 = vset.pattern.permute.xlu0 0
        %320 = vperm.xlu0 %319, %v315
        %v321 = vpop.permute.xlu0 %320
        %324 = vset.pattern.permute.xlu0 0
        %325 = vperm.xlu0 %324, %v316
        %v326 = vpop.permute.xlu0 %325
        %329 = vset.pattern.permute.xlu0 0
        %330 = vperm.xlu0 %329, %v317
        %v331 = vpop.permute.xlu0 %330
        %vm333 = vcmask 97280
        %v335 = vsel %vm333, %v312, 0
        %v338 = vsel %vm333, %v313, 0
        %v341 = vsel %vm333, %v314, 0
        %v344 = vsel %vm333, %v248, 0
        %v347 = vsel %vm333, %v249, 0
        %v350 = vsel %vm333, %v250, 0
        %v353 = vsel %vm333, %v251, 0
        %v356 = vsel %vm333, %v252, 0
        %v359 = vsel %vm333, %v253, 0
        %v362 = vsel %vm333, %v254, 0
        %v365 = vsel %vm333, %v255, 0
        %v368 = vsel %vm333, %v256, 0
        %v371 = vsel %vm333, %v257, 0
        %v374 = vsel %vm333, %v258, 0
        %v377 = vsel %vm333, %v259, 0
        %v380 = vsel %vm333, %v260, 0
        %v383 = vsel %vm333, %v261, 0
        %v386 = vsel %vm333, %v262, 0
        %v389 = vsel %vm333, %v263, 0
        %v392 = vsel %vm333, %v264, 0
        %v395 = vsel %vm333, %v265, 0
        %v398 = vsel %vm333, %v266, 0
        %v401 = vsel %vm333, %v267, 0
        %v404 = vsel %vm333, %v268, 0
        %v407 = vsel %vm333, %v269, 0
        %v410 = vsel %vm333, %v270, 0
        %v413 = vsel %vm333, %v271, 0
        %v416 = vsel %vm333, %v272, 0
        %v419 = vsel %vm333, %v273, 0
        %v422 = vsel %vm333, %v274, 0
        %v425 = vsel %vm333, %v275, 0
        %v428 = vsel %vm333, %v276, 0
        %v431 = vsel %vm333, %v277, 0
        %v434 = vsel %vm333, %v278, 0
        %v437 = vsel %vm333, %v279, 0
        %v440 = vsel %vm333, %v280, 0
        %v443 = vsel %vm333, %v281, 0
        %v446 = vsel %vm333, %v282, 0
        %v449 = vsel %vm333, %v283, 0
        %v452 = vsel %vm333, %v284, 0
        %v455 = vsel %vm333, %v285, 0
        %v458 = vsel %vm333, %v286, 0
        %v461 = vsel %vm333, %v287, 0
        %v464 = vsel %vm333, %v288, 0
        %v467 = vsel %vm333, %v289, 0
        %v470 = vsel %vm333, %v290, 0
        %v473 = vsel %vm333, %v291, 0
        %v476 = vsel %vm333, %v292, 0
        %v479 = vsel %vm333, %v293, 0
        %v482 = vsel %vm333, %v294, 0
        %v485 = vsel %vm333, %v295, 0
        %v488 = vsel %vm333, %v296, 0
        %v491 = vsel %vm333, %v297, 0
        %v494 = vsel %vm333, %v298, 0
        %v497 = vsel %vm333, %v299, 0
        %v500 = vsel %vm333, %v300, 0
        %v503 = vsel %vm333, %v301, 0
        %v506 = vsel %vm333, %v302, 0
        %v509 = vsel %vm333, %v303, 0
        %v512 = vsel %vm333, %v304, 0
        %v515 = vsel %vm333, %v305, 0
        %v518 = vsel %vm333, %v306, 0
        %v521 = vsel %vm333, %v307, 0
        %v524 = vsel %vm333, %v308, 0
        %v527 = vsel %vm333, %v309, 0
        %v530 = vsel %vm333, %v310, 0
        %v533 = vsel %vm333, %v311, 0
        %535 = vmatprep.subr.mxu0 0.0
        %536 = vmatpush1.xpose.msra.mxu0 %v344
        %537 = vmatprep.subr.mxu0 0.0
        %538 = vmatpush1.xpose.msra.mxu0 %v347
        %539 = vmatprep.subr.mxu0 0.0
        %540 = vmatpush1.xpose.msra.mxu0 %v350
        %541 = vmatprep.subr.mxu0 0.0
        %542 = vmatpush1.xpose.msra.mxu0 %v353
        %543 = vmatprep.subr.mxu0 0.0
        %544 = vmatpush1.xpose.msra.mxu0 %v356
        %545 = vmatprep.subr.mxu0 0.0
        %546 = vmatpush1.xpose.msra.mxu0 %v359
        %547 = vmatprep.subr.mxu0 0.0
        %548 = vmatpush1.xpose.msra.mxu0 %v362
        %549 = vmatprep.subr.mxu0 0.0
        %550 = vmatpush1.xpose.msra.mxu0 %v365
        %551 = vmatprep.subr.mxu0 0.0
        %552 = vmatpush1.xpose.msra.mxu0 %v368
        %553 = vmatprep.subr.mxu0 0.0
        %554 = vmatpush1.xpose.msra.mxu0 %v371
        %555 = vmatprep.subr.mxu0 0.0
        %556 = vmatpush1.xpose.msra.mxu0 %v374
        %557 = vmatprep.subr.mxu0 0.0
        %558 = vmatpush1.xpose.msra.mxu0 %v377
        %559 = vmatprep.subr.mxu0 0.0
        %560 = vmatpush1.xpose.msra.mxu0 %v380
        %561 = vmatprep.subr.mxu0 0.0
        %562 = vmatpush1.xpose.msra.mxu0 %v383
        %563 = vmatprep.subr.mxu0 0.0
        %564 = vmatpush1.xpose.msra.mxu0 %v386
        %565 = vmatprep.subr.mxu0 0.0
        %566 = vmatpush1.xpose.msra.mxu0 %v389
        %567 = vmatprep.subr.mxu0 0.0
        %568 = vmatpush1.xpose.msra.mxu0 %v392
        %569 = vmatprep.subr.mxu0 0.0
        %570 = vmatpush1.xpose.msra.mxu0 %v395
        %571 = vmatprep.subr.mxu0 0.0
        %572 = vmatpush1.xpose.msra.mxu0 %v398
        %573 = vmatprep.subr.mxu0 0.0
        %574 = vmatpush1.xpose.msra.mxu0 %v401
        %575 = vmatprep.subr.mxu0 0.0
        %576 = vmatpush1.xpose.msra.mxu0 %v404
        %577 = vmatprep.subr.mxu0 0.0
        %578 = vmatpush1.xpose.msra.mxu0 %v407
        %579 = vmatprep.subr.mxu0 0.0
        %580 = vmatpush1.xpose.msra.mxu0 %v410
        %581 = vmatprep.subr.mxu0 0.0
        %582 = vmatpush1.xpose.msra.mxu0 %v413
        %583 = vmatprep.subr.mxu0 0.0
        %584 = vmatpush1.xpose.msra.mxu0 %v416
        %585 = vmatprep.subr.mxu0 0.0
        %586 = vmatpush1.xpose.msra.mxu0 %v419
        %587 = vmatprep.subr.mxu0 0.0
        %588 = vmatpush1.xpose.msra.mxu0 %v422
        %589 = vmatprep.subr.mxu0 0.0
        %590 = vmatpush1.xpose.msra.mxu0 %v425
        %591 = vmatprep.subr.mxu0 0.0
        %592 = vmatpush1.xpose.msra.mxu0 %v428
        %593 = vmatprep.subr.mxu0 0.0
        %594 = vmatpush1.xpose.msra.mxu0 %v431
        %595 = vmatprep.subr.mxu0 0.0
        %596 = vmatpush1.xpose.msra.mxu0 %v434
        %597 = vmatprep.subr.mxu0 0.0
        %598 = vmatpush1.xpose.msra.mxu0 %v437
        %599 = vmatprep.mubr.f32.mxu0 0.0
        %600 = vmatmul.mubr.f32.gmra.mrb[0].mxu0 %v335
        %v601 = vpop.f32.mrb[0].mxu0
        %v602 = vadd.f32 %v321, %v601
        %v603 = vpop.f32.mrb[0].mxu0
        %v604 = vadd.f32 %v321, %v603
        %605 = vmatprep.mubr.f32.mxu0 0.0
        %606 = vmatmul.mubr.f32.gmra.mrb[0].mxu0 %v338
        %v607 = vpop.f32.mrb[0].mxu0
        %v608 = vadd.f32 %v326, %v607
        %v609 = vpop.f32.mrb[0].mxu0
        %v610 = vadd.f32 %v326, %v609
        %611 = vmatprep.mubr.f32.mxu0 0.0
        %612 = vmatmul.mubr.f32.gmra.mrb[0].mxu0 %v341
        %v613 = vpop.f32.mrb[0].mxu0
        %v614 = vadd.f32 %v331, %v613
        %v615 = vpop.f32.mrb[0].mxu0
        %v616 = vadd.f32 %v331, %v615
        %617 = vdwg.mxu0
        %618 = vmatprep.subr.mxu0 0.0
        %619 = vmatpush1.xpose.msra.mxu0 %v440
        %620 = vmatprep.subr.mxu0 0.0
        %621 = vmatpush1.xpose.msra.mxu0 %v443
        %622 = vmatprep.subr.mxu0 0.0
        %623 = vmatpush1.xpose.msra.mxu0 %v446
        %624 = vmatprep.subr.mxu0 0.0
        %625 = vmatpush1.xpose.msra.mxu0 %v449
        %626 = vmatprep.subr.mxu0 0.0
        %627 = vmatpush1.xpose.msra.mxu0 %v452
        %628 = vmatprep.subr.mxu0 0.0
        %629 = vmatpush1.xpose.msra.mxu0 %v455
        %630 = vmatprep.subr.mxu0 0.0
        %631 = vmatpush1.xpose.msra.mxu0 %v458
        %632 = vmatprep.subr.mxu0 0.0
        %633 = vmatpush1.xpose.msra.mxu0 %v461
        %634 = vmatprep.subr.mxu0 0.0
        %635 = vmatpush1.xpose.msra.mxu0 %v464
        %636 = vmatprep.subr.mxu0 0.0
        %637 = vmatpush1.xpose.msra.mxu0 %v467
        %638 = vmatprep.subr.mxu0 0.0
        %639 = vmatpush1.xpose.msra.mxu0 %v470
        %640 = vmatprep.subr.mxu0 0.0
        %641 = vmatpush1.xpose.msra.mxu0 %v473
        %642 = vmatprep.subr.mxu0 0.0
        %643 = vmatpush1.xpose.msra.mxu0 %v476
        %644 = vmatprep.subr.mxu0 0.0
        %645 = vmatpush1.xpose.msra.mxu0 %v479
        %646 = vmatprep.subr.mxu0 0.0
        %647 = vmatpush1.xpose.msra.mxu0 %v482
        %648 = vmatprep.subr.mxu0 0.0
        %649 = vmatpush1.xpose.msra.mxu0 %v485
        %650 = vmatprep.subr.mxu0 0.0
        %651 = vmatpush1.xpose.msra.mxu0 %v488
        %652 = vmatprep.subr.mxu0 0.0
        %653 = vmatpush1.xpose.msra.mxu0 %v491
        %654 = vmatprep.subr.mxu0 0.0
        %655 = vmatpush1.xpose.msra.mxu0 %v494
        %656 = vmatprep.subr.mxu0 0.0
        %657 = vmatpush1.xpose.msra.mxu0 %v497
        %658 = vmatprep.subr.mxu0 0.0
        %659 = vmatpush1.xpose.msra.mxu0 %v500
        %660 = vmatprep.subr.mxu0 0.0
        %661 = vmatpush1.xpose.msra.mxu0 %v503
        %662 = vmatprep.subr.mxu0 0.0
        %663 = vmatpush1.xpose.msra.mxu0 %v506
        %664 = vmatprep.subr.mxu0 0.0
        %665 = vmatpush1.xpose.msra.mxu0 %v509
        %666 = vmatprep.subr.mxu0 0.0
        %667 = vmatpush1.xpose.msra.mxu0 %v512
        %668 = vmatprep.subr.mxu0 0.0
        %669 = vmatpush1.xpose.msra.mxu0 %v515
        %670 = vmatprep.subr.mxu0 0.0
        %671 = vmatpush1.xpose.msra.mxu0 %v518
        %672 = vmatprep.subr.mxu0 0.0
        %673 = vmatpush1.xpose.msra.mxu0 %v521
        %674 = vmatprep.subr.mxu0 0.0
        %675 = vmatpush1.xpose.msra.mxu0 %v524
        %676 = vmatprep.subr.mxu0 0.0
        %677 = vmatpush1.xpose.msra.mxu0 %v527
        %678 = vmatprep.subr.mxu0 0.0
        %679 = vmatpush1.xpose.msra.mxu0 %v530
        %680 = vmatprep.subr.mxu0 0.0
        %681 = vmatpush1.xpose.msra.mxu0 %v533
        %682 = vmatprep.mubr.f32.mxu0 0.0
        %683 = vmatmul.mubr.f32.gmra.mrb[0].mxu0 %v335
        %v684 = vpop.f32.mrb[0].mxu0
        %v685 = vadd.f32 %v321, %v684
        %v686 = vpop.f32.mrb[0].mxu0
        %v687 = vadd.f32 %v321, %v686
        %688 = vmatprep.mubr.f32.mxu0 0.0
        %689 = vmatmul.mubr.f32.gmra.mrb[0].mxu0 %v338
        %v690 = vpop.f32.mrb[0].mxu0
        %v691 = vadd.f32 %v326, %v690
        %v692 = vpop.f32.mrb[0].mxu0
        %v693 = vadd.f32 %v326, %v692
        %694 = vmatprep.mubr.f32.mxu0 0.0
        %695 = vmatmul.mubr.f32.gmra.mrb[0].mxu0 %v341
        %v696 = vpop.f32.mrb[0].mxu0
        %v697 = vadd.f32 %v331, %v696
        %v698 = vpop.f32.mrb[0].mxu0
        %v699 = vadd.f32 %v331, %v698
        %700 = vdwg.mxu0
        %v701 = vtanh.pop %v602
        %v702 = vtanh.pop %v604
        %v703 = vtanh.pop %v685
        %v704 = vtanh.pop %v687
        %v705 = vtanh.pop %v608
        %v706 = vtanh.pop %v610
        %v707 = vtanh.pop %v691
        %v708 = vtanh.pop %v693
        %v709 = vtanh.pop %v614
        %v710 = vtanh.pop %v616
        %v711 = vtanh.pop %v697
        %v712 = vtanh.pop %v699
        %v713 = vld [vmem:[%s3] sm:$0xff]
        %v714 = vld [vmem:[%s3 + $0x8] sm:$0xff]
        %v715 = vld [vmem:[%s3 + $0x10] sm:$0x1f]
        %717 = vset.pattern.permute.xlu0 0
        %718 = vperm.xlu0 %717, %v713
        %v719 = vpop.permute.xlu0 %718
        %722 = vset.pattern.permute.xlu0 0
        %723 = vperm.xlu0 %722, %v714
        %v724 = vpop.permute.xlu0 %723
        %727 = vset.pattern.permute.xlu0 0
        %728 = vperm.xlu0 %727, %v715
        %v729 = vpop.permute.xlu0 %728
        %v731 = vmul.f32 %v701, %v719
        %v732 = vmul.f32 %v702, %v719
        %v733 = vmul.f32 %v703, %v719
        %v734 = vmul.f32 %v704, %v719
        %v735 = vmul.f32 %v705, %v724
        %v736 = vmul.f32 %v706, %v724
        %v737 = vmul.f32 %v707, %v724
        %v738 = vmul.f32 %v708, %v724
        %v739 = vmul.f32 %v709, %v729
        %v740 = vmul.f32 %v710, %v729
        %v741 = vmul.f32 %v711, %v729
        %v742 = vmul.f32 %v712, %v729
        %v743 = vadd.f32 %v731, %v735
        %vm744 = vcmask 1044480
        %v745 = vsel %vm744, %v739, 0.0
        %v746 = vadd.f32 %v743, %v745
        %v747 = vrot.slane %v746, 4
        %v748 = vadd.f32 %v746, %v747
        %v749 = vrot.slane %v748, 2
        %v750 = vadd.f32 %v748, %v749
        %v751 = vrot.slane %v750, 1
        %v752 = vadd.f32 %v750, %v751
        %v753 = vadd.f32 %v732, %v736
        %v754 = vsel %vm744, %v740, 0.0
        %v755 = vadd.f32 %v753, %v754
        %v756 = vrot.slane %v755, 4
        %v757 = vadd.f32 %v755, %v756
        %v758 = vrot.slane %v757, 2
        %v759 = vadd.f32 %v757, %v758
        %v760 = vrot.slane %v759, 1
        %v761 = vadd.f32 %v759, %v760
        %v762 = vadd.f32 %v733, %v737
        %v763 = vsel %vm744, %v741, 0.0
        %v764 = vadd.f32 %v762, %v763
        %v765 = vrot.slane %v764, 4
        %v766 = vadd.f32 %v764, %v765
        %v767 = vrot.slane %v766, 2
        %v768 = vadd.f32 %v766, %v767
        %v769 = vrot.slane %v768, 1
        %v770 = vadd.f32 %v768, %v769
        %v771 = vadd.f32 %v734, %v738
        %v772 = vsel %vm744, %v742, 0.0
        %v773 = vadd.f32 %v771, %v772
        %v774 = vrot.slane %v773, 4
        %v775 = vadd.f32 %v773, %v774
        %v776 = vrot.slane %v775, 2
        %v777 = vadd.f32 %v775, %v776
        %v778 = vrot.slane %v777, 1
        %v779 = vadd.f32 %v777, %v778
        %v780 = vld [vmem:[#allocation2] sm:$0x1]
        %782 = vset.pattern.permute.xlu0 0
        %783 = vperm.xlu0 %782, %v780
        %v784 = vpop.permute.xlu0 %783
        %v786 = vlaneseq
        %v787 = vshrl.u32 %v786, 7
        %v788 = vsub.s32 0, %v787
        %v789 = vrot.slane %v784, %v788
        %v790 = vadd.f32 %v752, %v789
        %v791 = vadd.f32 %v761, %v789
        %v792 = vadd.f32 %v770, %v789
        %v793 = vadd.f32 %v779, %v789
        %v798 = vcombine.low %v790, %v791
        %v799 = vcombine.low %v792, %v793
        %v801 = vunpack.c.l.s4 1966171168
        %v802 = vunpack.c.0.s8 %v801
        %v803 = vlaneseq
        %v804 = vshrl.u32 %v803, 7
        %v805 = vsub.s32 %v802, %v804
        %v806 = vrot.slane %v798, %v805
        %v808 = vunpack.c.l.s4 1966171168
        %v809 = vunpack.c.0.s8 %v808
        %v810 = vlaneseq
        %v811 = vshrl.u32 %v810, 7
        %v812 = vsub.s32 %v809, %v811
        %v813 = vrot.slane %v799, %v812
        %v814 = vcombine.low %v806, %v813
        %v816 = vunpack.c.l.s4 1966171168
        %v817 = vunpack.c.0.s8 %v816
        %v818 = vlaneseq
        %v819 = vshrl.u32 %v818, 7
        %v820 = vsub.s32 %v817, %v819
        %v821 = vrot.slane %v814, %v820
        %v823 = vlaneseq
        %vm824 = vcmp.ge.s32.totalorder %v823, 0
        %vm825 = vcmp.lt.s32.totalorder %v823, 512
        %vm826 = vmand %vm824, %vm825
        %827 = vst.msk [vmem:[%s232] sm:$0xf] %vm826, %v821
        %s828 = sand.u32 %s139, 1
        %s829 = scalar_lea.sflag [#allocation4], %s828
        %s830 = sand.u32 %s139, 1
        %s831 = smul.addr %s830, 4
        %s832 = scalar_lea.vmem [#allocation3], %s831
        // Predicated region
        $region41: #{tpu_custom_call.1} parent=39 // pred_check
          %p833 = pneg %p149
        $region42: #{tpu_custom_call.1} parent=39 // pred_check_branch
          %835 = sbr.rel (%p833) target = $region44
        $region43: #{tpu_custom_call.1} parent=39 // pred_region
          %s836 = smul.u32 4, %s21
          %s838 = ssub.s32 64, 64
          %839 = vsyncadd %s829, %s838
          %s840 = smul.addr %s836, 16
          %s841 = scalar_lea.hbm %s5, %s840
          %s843 = sshll.u32 %s832, 4
          %s844 = int_to_ptr.vmem [resolvable:$true] %s843
          %846 = dma.vmem_to_hbm [thread:$0]  %s844, 64, %s841, %s829
        $region44: #{tpu_custom_call.1} parent=39 // pred_fallthru
          _
      $region40: #{tpu_custom_call.1} parent=5 // pred_fallthru
        _
      %p847 = scmp.le.s32.totalorder 2, %s16
      // Predicated region
      $region45: #{tpu_custom_call.1} parent=5 // pred_check
        %p848 = pneg %p847
      $region46: #{tpu_custom_call.1} parent=5 // pred_check_branch
        %850 = sbr.rel (%p848) target = $region48
      $region47: #{tpu_custom_call.1} parent=5 // pred_region
        %s851 = ssub.s32 %s16, 2
        // Predicated region
        $region49: #{tpu_custom_call.1} parent=47 // pred_check
          %p852 = pneg %p155
        $region50: #{tpu_custom_call.1} parent=47 // pred_check_branch
          %854 = sbr.rel (%p852) target = $region52
        $region51: #{tpu_custom_call.1} parent=47 // pred_region
          %s855 = sand.u32 %s140, 1
          %s856 = scalar_lea.sflag [#allocation4], %s855
          %s857 = sand.u32 %s140, 1
          %s858 = smul.addr %s857, 4
          %s859 = scalar_lea.vmem [#allocation3], %s858
          %860 = dma.done %s856, 64
        $region52: #{tpu_custom_call.1} parent=47 // pred_fallthru
          _
      $region48: #{tpu_custom_call.1} parent=5 // pred_fallthru
        _
    $region6: #{tpu_custom_call.1} parent=1 // loop_footer
      %s20 = sadd.s32 1, %s16
    $region7: #{tpu_custom_call.1} parent=1 // loop_footer_branch
      %15 = sbr.rel target = $region3
    $region8: #{tpu_custom_call.1} parent=1 // loop_exit
      _
    %861 = vsyncpa [#allocation4], 1
    %s862 = scalar_lea.sflag [#allocation4], 1
    %863 = vsyncpa %s862, 1

</llo_original>
